<compile_context>
chip_gen: v5e
topology: v5e:2x2
jax: 0.10.0
libtpu: 0.0.40
codegen_flags: <defaults>
</compile_context>

<pallas_src>
import functools
import math

import jax
import jax.numpy as jnp
from jax.experimental import pallas as pl
from jax.experimental.pallas import tpu as pltpu


# ----------------------------------------------------------------------------
# Kernel 1: fused QKV projection (LoRA merged into the weights on the host).
#   q    (B, S, H)   = x @ Wq_eff            (Wq_eff pre-scaled by 1/sqrt(d))
#   kvT  (B, 2H, S)  = [Wk_eff ; Wv_eff]^T @ x^T   (head-major-on-sublanes layout)
# ----------------------------------------------------------------------------
def _qkv_proj_kernel(x_ref, wq_ref, wkvT_ref, q_ref, kvT_ref):
    x = x_ref[0]                                                   # (ts, H) bf16
    q = jnp.dot(x, wq_ref[...], preferred_element_type=jnp.float32)
    q_ref[0] = q.astype(q_ref.dtype)

    xt = x.T                                                       # (H, ts), one transpose per tile
    kv_t = jnp.dot(wkvT_ref[...], xt,
                   preferred_element_type=jnp.float32)             # (2H, ts) f32 acc
    kvT_ref[0] = kv_t.astype(kvT_ref.dtype)


# ----------------------------------------------------------------------------
# Kernel 2: attention + output projection.
#   Grid (B, S//tq); kvT block index depends only on b -> K/V resident in VMEM
#   and reused across every q tile of that batch element.
#   Per head: sublane-slice K^T_h (d,S) / V^T_h (d,S), full-row softmax on the
#   (tq, S) scores, context written into its lane slice of a (tq, H) scratch.
#   Finally one lane-dense (tq,H)@(H,H) output projection + bias.
# ----------------------------------------------------------------------------
def _attn_out_kernel(q_ref, kvT_ref, wo_ref, bo_ref, out_ref, ctx_ref, *, heads):
    tq = q_ref.shape[1]
    H = q_ref.shape[2]
    d = H // heads

    q = q_ref[0]                                                   # (tq, H) bf16 (pre-scaled)

    for h in range(heads):                                         # static, unrolled
        lo, hi = h * d, (h + 1) * d
        q_h = q[:, lo:hi]                                          # (tq, d) small lane slice
        kT_h = kvT_ref[0, lo:hi, :]                                # (d, S)  sublane slice
        vT_h = kvT_ref[0, H + lo:H + hi, :]                        # (d, S)  sublane slice

        s = jnp.dot(q_h, kT_h, preferred_element_type=jnp.float32)   # (tq, S) f32
        m = jnp.max(s, axis=-1, keepdims=True)                        # (tq, 1)
        p = jnp.exp(s - m)                                             # (tq, S) f32
        l = jnp.sum(p, axis=-1, keepdims=True)                         # (tq, 1)

        pv = jnp.einsum('qs,ds->qd', p.astype(jnp.bfloat16), vT_h,
                        preferred_element_type=jnp.float32)            # (tq, d)
        ctx_ref[:, lo:hi] = pv / l                                     # exact divide, in-place

    ctx = ctx_ref[...].astype(jnp.bfloat16)                            # (tq, H)
    out = jnp.dot(ctx, wo_ref[...],
                  preferred_element_type=jnp.float32) + bo_ref[...]
    out_ref[0] = out.astype(out_ref.dtype)


# ----------------------------------------------------------------------------
# Wrapper
# ----------------------------------------------------------------------------
def _vmem_limit_bytes():
    # Per-generation VMEM budgeting: ~3/4 of physical capacity, capped at 100 MiB.
    #   v5e/v6e (128 MiB physical) -> 96 MiB ; v7x (64 MiB physical) -> 48 MiB.
    try:
        cap = pltpu.get_tpu_info().vmem_capacity_bytes
    except Exception:
        cap = 64 * 1024 * 1024
    return int(min(cap * 3 // 4, 100 * 1024 * 1024))


def lora_attn_processor(x, params, *, heads, lora_scale,
                        proj_tile=256, q_tile=256):
    """x: (B, S, H) float32.  params: dict of right-multiply (in, out) weights.

    proj_tile / q_tile: 256 fills the v6e/v7x 256-wide MXU; use 128 on v5e.
    """
    B, S, H = x.shape
    assert H % heads == 0, "hidden must be divisible by heads"
    d = H // heads
    attn_scale = 1.0 / math.sqrt(d)

    ts = min(proj_tile, S)
    tq = min(q_tile, S)
    assert S % ts == 0 and S % tq == 0, "S must divide the tiles"

    # Host-side LoRA merge (exact: y + s*(y@down)@up == x @ (W + s*W@down@up)).
    # NOTE: W_eff is then cast to bf16; for very small lora_scale the LoRA
    # contribution can be partially rounded away (bf16 ~8 mantissa bits).
    def merge(w, down, up):
        return w + lora_scale * jnp.dot(jnp.dot(w, down), up)

    wq_eff = (merge(params['wq'], params['q_down'], params['q_up'])
              * attn_scale).astype(jnp.bfloat16)                     # fold 1/sqrt(d) into Wq
    wk_eff = merge(params['wk'], params['k_down'], params['k_up'])
    wv_eff = merge(params['wv'], params['v_down'], params['v_up'])
    wkvT = jnp.concatenate([wk_eff.T, wv_eff.T], axis=0).astype(jnp.bfloat16)  # (2H, H)
    wo = params['wo'].astype(jnp.bfloat16)
    bo = params['bo'].astype(jnp.float32)
    x_bf16 = x.astype(jnp.bfloat16)                                  # halve kernel-1 input DMA

    vmem_limit = _vmem_limit_bytes()

    # ---------------- QKV projection (head-friendly layouts) ----------------
    q, kvT = pl.pallas_call(
        _qkv_proj_kernel,
        out_shape=(jax.ShapeDtypeStruct((B, S, H), jnp.bfloat16),
                   jax.ShapeDtypeStruct((B, 2 * H, S), jnp.bfloat16)),
        grid_spec=pltpu.PrefetchScalarGridSpec(
            num_scalar_prefetch=0,
            grid=(B, S // ts),
            in_specs=[
                pl.BlockSpec((1, ts, H), lambda b, i: (b, i, 0)),    # x tile
                pl.BlockSpec((H, H), lambda b, i: (0, 0)),           # Wq_eff (const index)
                pl.BlockSpec((2 * H, H), lambda b, i: (0, 0)),       # [Wk;Wv]^T (const index)
            ],
            out_specs=(
                pl.BlockSpec((1, ts, H), lambda b, i: (b, i, 0)),    # q
                pl.BlockSpec((1, 2 * H, ts), lambda b, i: (b, 0, i)),  # kvT (transposed slab)
            ),
        ),
        compiler_params=pltpu.CompilerParams(
            dimension_semantics=("parallel", "parallel"),
            vmem_limit_bytes=vmem_limit),
    )(x_bf16, wq_eff, wkvT)

    # ------------- attention (resident K/V) + output projection -------------
    out = pl.pallas_call(
        functools.partial(_attn_out_kernel, heads=heads),
        out_shape=jax.ShapeDtypeStruct((B, S, H), x.dtype),
        grid_spec=pltpu.PrefetchScalarGridSpec(
            num_scalar_prefetch=0,
            grid=(B, S // tq),
            in_specs=[
                pl.BlockSpec((1, tq, H), lambda b, i: (b, i, 0)),       # q tile
                pl.BlockSpec((1, 2 * H, S), lambda b, i: (b, 0, 0)),    # K^T/V^T: resident per batch
                pl.BlockSpec((H, H), lambda b, i: (0, 0)),              # Wo
                pl.BlockSpec((1, H), lambda b, i: (0, 0)),              # bo
            ],
            out_specs=pl.BlockSpec((1, tq, H), lambda b, i: (b, i, 0)),
            scratch_shapes=[
                pltpu.VMEM((tq, H), jnp.float32),   # per-head context, written in place
            ],
        ),
        compiler_params=pltpu.CompilerParams(
            dimension_semantics=("parallel", "parallel"),
            vmem_limit_bytes=vmem_limit),
    )(q, kvT, wo, bo)

    return out


# ----------------------------------------------------------------------------
# Pure-JAX reference mirroring the PyTorch forward (f32 end to end).
# ----------------------------------------------------------------------------
def _reference(x, params, *, heads, lora_scale):
    B, S, H = x.shape
    d = H // heads
    attn_scale = 1.0 / math.sqrt(d)

    def proj(w, down, up):
        y = x @ w
        return y + lora_scale * ((y @ down) @ up)

    q = proj(params['wq'], params['q_down'], params['q_up'])
    k = proj(params['wk'], params['k_down'], params['k_up'])
    v = proj(params['wv'], params['v_down'], params['v_up'])

    def h2b(t):  # (B,S,H) -> (B*heads, S, d)
        return t.reshape(B, S, heads, d).transpose(0, 2, 1, 3).reshape(B * heads, S, d)

    qh, kh, vh = h2b(q), h2b(k), h2b(v)
    scores = jnp.einsum('bqd,bkd->bqk', qh, kh) * attn_scale
    probs = jax.nn.softmax(scores, axis=-1)
    ctx = jnp.einsum('bqk,bkd->bqd', probs, vh)
    ctx = ctx.reshape(B, heads, S, d).transpose(0, 2, 1, 3).reshape(B, S, H)
    return ctx @ params['wo'] + params['bo']


def _init_params(key, hidden_size, rank):
    ks = jax.random.split(key, 11)
    n = lambda k, shape, s: (jax.random.normal(k, shape, jnp.float32) * s)
    # nn.Linear weight is (out, in); we store the transposed (in, out) form.
    return {
        'wq':     n(ks[0], (hidden_size, hidden_size), 0.05),
        'wk':     n(ks[1], (hidden_size, hidden_size), 0.05),
        'wv':     n(ks[2], (hidden_size, hidden_size), 0.05),
        'wo':     n(ks[3], (hidden_size, hidden_size), 0.05),
        'bo':     n(ks[4], (1, hidden_size), 0.05),
        'q_down': n(ks[5], (hidden_size, rank), 0.05),
        'q_up':   n(ks[6], (rank, hidden_size), 0.05),
        'k_down': n(ks[7], (hidden_size, rank), 0.05),
        'k_up':   n(ks[8], (rank, hidden_size), 0.05),
        'v_down': n(ks[9], (hidden_size, rank), 0.05),
        'v_up':   n(ks[10], (rank, hidden_size), 0.05),
    }


if __name__ == "__main__":
    # Small but tile-friendly shapes (lane-aligned H, two q-tiles per batch so
    # the resident-K/V reuse path is actually exercised).
    B, S, H = 2, 512, 128
    heads, rank = 4, 4
    module_scale, call_scale = 1.0, 1.0
    lora_scale = module_scale * call_scale

    key = jax.random.PRNGKey(0)
    kx, kp = jax.random.split(key)
    x = jax.random.normal(kx, (B, S, H), jnp.float32)
    params = _init_params(kp, H, rank)

    out = lora_attn_processor(x, params, heads=heads, lora_scale=lora_scale)
    out = jax.block_until_ready(out)

    ref = _reference(x, params, heads=heads, lora_scale=lora_scale)
    assert out.shape == (B, S, H)
    max_err = float(jnp.max(jnp.abs(out - ref)))
    # bf16 matmul inputs (f32 accumulation / f32 softmax) -> loosened tolerance.
    assert jnp.allclose(out, ref, rtol=3e-2, atol=3e-2), \
        f"Pallas kernel mismatch vs reference (max abs err {max_err})"

    print("KERNEL_OK")
</pallas_src>

<mosaic_0001>
module attributes {stable_mosaic.version = 11 : i64} {
  func.func @_qkv_proj_kernel(%arg0: i32, %arg1: i32, %arg2: memref<1x256x128xbf16, #tpu.memory_space<vmem>>, %arg3: memref<128x128xbf16, #tpu.memory_space<vmem>>, %arg4: memref<256x128xbf16, #tpu.memory_space<vmem>>, %arg5: memref<1x256x128xbf16, #tpu.memory_space<vmem>>, %arg6: memref<1x256x256xbf16, #tpu.memory_space<vmem>>) attributes {dimension_semantics = [#tpu.dimension_semantics<parallel>, #tpu.dimension_semantics<parallel>], iteration_bounds = array<i64: 2, 2>, scalar_prefetch = 0 : i64, scratch_operands = 0 : i64, tpu.core_type = #tpu.core_type<tc>, window_params = [{transform_indices = @transform_0, window_bounds = array<i64: 1, 256, 128>}, {pipeline_mode = #tpu.pipeline_mode<synchronous>, transform_indices = @transform_1, window_bounds = array<i64: 128, 128>}, {pipeline_mode = #tpu.pipeline_mode<synchronous>, transform_indices = @transform_2, window_bounds = array<i64: 256, 128>}, {transform_indices = @transform_3, window_bounds = array<i64: 1, 256, 128>}, {transform_indices = @transform_4, window_bounds = array<i64: 1, 256, 256>}]} {
    %c0 = arith.constant 0 : index
    %c0_0 = arith.constant 0 : index
    %c0_1 = arith.constant 0 : index
    %0 = vector.load %arg2[%c0, %c0_0, %c0_1] : memref<1x256x128xbf16, #tpu.memory_space<vmem>>, vector<1x256x128xbf16>
    %1 = vector.shape_cast %0 : vector<1x256x128xbf16> to vector<256x128xbf16>
    %c0_2 = arith.constant 0 : index
    %c0_3 = arith.constant 0 : index
    %2 = vector.load %arg3[%c0_2, %c0_3] : memref<128x128xbf16, #tpu.memory_space<vmem>>, vector<128x128xbf16>
    %cst = arith.constant dense<0.000000e+00> : vector<256x128xf32>
    %3 = tpu.matmul %1, %2, %cst {dimension_numbers = #tpu.dot_dimension_numbers<[1], [0], [0], [1], [0, 0, 1, 1], [], []>} : vector<256x128xbf16>, vector<128x128xbf16>, vector<256x128xf32> -> vector<256x128xf32>
    %4 = arith.truncf %3 : vector<256x128xf32> to vector<256x128xbf16>
    %c0_4 = arith.constant 0 : index
    %c0_5 = arith.constant 0 : index
    %c0_6 = arith.constant 0 : index
    %5 = vector.load %arg5[%c0_4, %c0_5, %c0_6] : memref<1x256x128xbf16, #tpu.memory_space<vmem>>, vector<1x256x128xbf16>
    %6 = vector.shape_cast %5 : vector<1x256x128xbf16> to vector<256x128xbf16>
    %7 = vector.shape_cast %4 : vector<256x128xbf16> to vector<1x256x128xbf16>
    tpu.vector_store %arg5[%c0_4, %c0_5, %c0_6], %7 {strides = array<i32>} : memref<1x256x128xbf16, #tpu.memory_space<vmem>>, vector<1x256x128xbf16>,
    %8 = tpu.transpose %1, [1, 0] : vector<256x128xbf16> -> vector<128x256xbf16>
    %c0_7 = arith.constant 0 : index
    %c0_8 = arith.constant 0 : index
    %9 = vector.load %arg4[%c0_7, %c0_8] : memref<256x128xbf16, #tpu.memory_space<vmem>>, vector<256x128xbf16>
    %cst_9 = arith.constant dense<0.000000e+00> : vector<256x256xf32>
    %10 = tpu.matmul %9, %8, %cst_9 {dimension_numbers = #tpu.dot_dimension_numbers<[1], [0], [0], [1], [0, 0, 1, 1], [], []>} : vector<256x128xbf16>, vector<128x256xbf16>, vector<256x256xf32> -> vector<256x256xf32>
    %11 = arith.truncf %10 : vector<256x256xf32> to vector<256x256xbf16>
    %c0_10 = arith.constant 0 : index
    %c0_11 = arith.constant 0 : index
    %c0_12 = arith.constant 0 : index
    %12 = vector.load %arg6[%c0_10, %c0_11, %c0_12] : memref<1x256x256xbf16, #tpu.memory_space<vmem>>, vector<1x256x256xbf16>
    %13 = vector.shape_cast %12 : vector<1x256x256xbf16> to vector<256x256xbf16>
    %14 = vector.shape_cast %11 : vector<256x256xbf16> to vector<1x256x256xbf16>
    tpu.vector_store %arg6[%c0_10, %c0_11, %c0_12], %14 {strides = array<i32>} : memref<1x256x256xbf16, #tpu.memory_space<vmem>>, vector<1x256x256xbf16>,
    return
  }
  func.func @transform_0(%arg0: i32, %arg1: i32) -> (i32, i32, i32) {
    %c0_i32 = arith.constant 0 : i32
    %c0_i32_0 = arith.constant 0 : i32
    return %arg0, %arg1, %c0_i32 : i32, i32, i32
  }
  func.func @transform_1(%arg0: i32, %arg1: i32) -> (i32, i32) {
    %c0_i32 = arith.constant 0 : i32
    %c0_i32_0 = arith.constant 0 : i32
    %c0_i32_1 = arith.constant 0 : i32
    return %c0_i32, %c0_i32_0 : i32, i32
  }
  func.func @transform_2(%arg0: i32, %arg1: i32) -> (i32, i32) {
    %c0_i32 = arith.constant 0 : i32
    %c0_i32_0 = arith.constant 0 : i32
    %c0_i32_1 = arith.constant 0 : i32
    return %c0_i32, %c0_i32_0 : i32, i32
  }
  func.func @transform_3(%arg0: i32, %arg1: i32) -> (i32, i32, i32) {
    %c0_i32 = arith.constant 0 : i32
    %c0_i32_0 = arith.constant 0 : i32
    return %arg0, %arg1, %c0_i32 : i32, i32, i32
  }
  func.func @transform_4(%arg0: i32, %arg1: i32) -> (i32, i32, i32) {
    %c0_i32 = arith.constant 0 : i32
    %c0_i32_0 = arith.constant 0 : i32
    return %arg0, %c0_i32, %arg1 : i32, i32, i32
  }
}

</mosaic_0001>

<llo_original>
// kernel: tpu_custom_call.1
$region0: #{tpu_custom_call.1}
  #allocation0 [shape = 'u32[]', space=smem, size = 0x4, offset = 0x4, fixed_abs, tag = 'smem constant byte address 0x4 - core index']
  #allocation1 [shape = 'u32[72,128]{1,0:T(1,128)}', space=vmem, size = 0x9000, scoped, tag = 'internal scratch']
  %s0 = inlined_call_operand.hbm [shape: bf16[2,512,128], index: 0, kind: input, shape index: {}]
  %s1 = inlined_call_operand.hbm [shape: bf16[128,128], index: 1, kind: input, shape index: {}]
  %s2 = inlined_call_operand.hbm [shape: bf16[256,128], index: 2, kind: input, shape index: {}]
  %s3 = inlined_call_operand.hbm [shape: bf16[2,512,128], index: 3, kind: output, shape index: {0}]
  %s4 = inlined_call_operand.hbm [shape: bf16[2,256,512], index: 4, kind: output, shape index: {1}]
  %5 = xla_tuple %s3, %s4
  %s6 = sld [smem:[#allocation0]]
  $region65: #{tpu_custom_call.1} parent=0
    _
  %s8 = ssub.s32 1, %s6
  %s9 = scalar_select 0, %s8, %s6
  $region1: #{tpu_custom_call.1} parent=0
    #allocation2 [shape = 'u8[131072]{0}', space=vmem, size = 0x20000, scoped, tag = 'input window, operand 0']
    #allocation3 [shape = 's32[2]{0}', space=sflag, size = 0x8, scoped, tag = 'scoped memory for tpu_custom_call.1']
    #allocation4 [shape = 's32[2]{0}', space=sflag, size = 0x8, scoped, tag = 'scoped memory for tpu_custom_call.1']
    #allocation5 [shape = 'u8[32768]{0}', space=vmem, size = 0x8000, scoped, tag = 'input window, operand 1, single buffered']
    #allocation6 [shape = 's32[1]{0}', space=sflag, size = 0x4, scoped, tag = 'scoped memory for tpu_custom_call.1']
    #allocation7 [shape = 'u8[65536]{0}', space=vmem, size = 0x10000, scoped, tag = 'input window, operand 2, single buffered']
    #allocation8 [shape = 'u8[131072]{0}', space=vmem, size = 0x20000, scoped, tag = 'output window, operand 0']
    #allocation9 [shape = 'u8[262144]{0}', space=vmem, size = 0x40000, scoped, tag = 'output window, operand 1']
    #allocation10 [shape = 's32[2]{0}', space=sflag, size = 0x8, scoped, tag = 'scoped memory for tpu_custom_call.1']
    %10 = vsyncpa [#allocation3], 0
    %s11 = scalar_lea.sflag [#allocation3], 1
    %12 = vsyncpa %s11, 0
    %13 = vsyncpa [#allocation6], 0
    %14 = vsyncpa [#allocation4], 0
    %s15 = scalar_lea.sflag [#allocation4], 1
    %16 = vsyncpa %s15, 0
    %17 = vsyncpa [#allocation10], 0
    %s18 = scalar_lea.sflag [#allocation10], 1
    %19 = vsyncpa %s18, 0
    loop: start=0, step=1, limit=6
    $region2: #{tpu_custom_call.1} parent=1 // loop_pre_header
      _
    $region3: #{tpu_custom_call.1} parent=1 // loop_header
      %s21 = sphi 0, %s25
      %p22 = scmp.ge.s32.totalorder %s21, 6
      %s28 = sphi 0, %s40
      %s29 = sphi 0, %s36
      %s30 = sphi 0, %s28
      %s31 = sphi 0, %s29
      %s32 = sphi 0, %s30
      %s33 = sphi 0, %s31
      %s45 = sphi 0, %s47
      %s48 = sphi 0, %s45
      %s49 = sphi 0, %s48
      %s65 = sphi 0, %s49
      %s69 = sphi 0, %s69
      %s71 = sphi 0, %s69
      %s72 = sphi 0, %s71
      %s86 = sphi 0, %s72
      %s90 = sphi 0, %s90
      %s92 = sphi 0, %s90
      %s93 = sphi 0, %s92
      %s107 = sphi 0, %s93
      %s115 = sphi 0, %s117
      %s118 = sphi 0, %s115
      %s119 = sphi 0, %s118
      %s135 = sphi 0, %s119
      %s143 = sphi 0, %s145
      %s146 = sphi 0, %s143
      %s147 = sphi 0, %s146
      %s163 = sphi 0, %s147
    $region4: #{tpu_custom_call.1} parent=1 // loop_header_branch
      %24 = sbr.rel (%p22) target = $region8
    $region5: #{tpu_custom_call.1} parent=1 // loop_body
      %s26 = ssub.s32 %s21, 1
      %s27 = ssub.s32 %s21, 2
      %s34 = sadd.s32 1, %s29
      %p35 = scmp.ge.s32.totalorder %s34, 2
      %s36 = scalar_select %p35, 0, %s34
      %s37 = sadd.s32 1, %s28
      %s38 = scalar_select %p35, %s37, %s28
      %p39 = scmp.ge.s32.totalorder %s38, 2
      %s40 = scalar_select %p39, 0, %s38
      %s41 = ssub.s32 %s28, %s40
      %s42 = ssub.s32 %s29, %s36
      %s43 = sor.u32 %s41, %s42
      %p44 = scmp.eq.s32.totalorder %s43, 0
      %s46 = sadd.s32 %s45, 1
      %s47 = scalar_select %p44, %s45, %s46
      %p50 = pneg %p44
      %p51 = scmp.eq.s32.totalorder %s21, 3
      %p52 = por %p50, %p51
      %p53 = scmp.ne.s32.totalorder %s45, %s48
      %p54 = scmp.eq.s32.totalorder %s21, 0
      %p55 = por %p53, %p54
      %p56 = scmp.ne.s32.totalorder %s45, %s48
      %p57 = scmp.eq.s32.totalorder %s26, 3
      %p58 = por %p56, %p57
      %p59 = scmp.ne.s32.totalorder %s48, %s49
      %p60 = scmp.eq.s32.totalorder %s26, 0
      %p61 = por %p59, %p60
      %p62 = scmp.ne.s32.totalorder %s48, %s49
      %p63 = scmp.eq.s32.totalorder %s27, 3
      %p64 = por %p62, %p63
      %p66 = scmp.ne.s32.totalorder %s49, %s65
      %p67 = scmp.eq.s32.totalorder %s27, 0
      %p68 = por %p66, %p67
      %s70 = sadd.s32 %s69, 1
      %p73 = scmp.eq.s32.totalorder %s21, 3
      %p74 = scmp.ne.s32.totalorder %s69, %s71
      %p75 = scmp.eq.s32.totalorder %s21, 0
      %p76 = por %p74, %p75
      %p77 = scmp.ne.s32.totalorder %s69, %s71
      %p78 = scmp.eq.s32.totalorder %s26, 3
      %p79 = por %p77, %p78
      %p80 = scmp.ne.s32.totalorder %s71, %s72
      %p81 = scmp.eq.s32.totalorder %s26, 0
      %p82 = por %p80, %p81
      %p83 = scmp.ne.s32.totalorder %s71, %s72
      %p84 = scmp.eq.s32.totalorder %s27, 3
      %p85 = por %p83, %p84
      %p87 = scmp.ne.s32.totalorder %s72, %s86
      %p88 = scmp.eq.s32.totalorder %s27, 0
      %p89 = por %p87, %p88
      %s91 = sadd.s32 %s90, 1
      %p94 = scmp.eq.s32.totalorder %s21, 3
      %p95 = scmp.ne.s32.totalorder %s90, %s92
      %p96 = scmp.eq.s32.totalorder %s21, 0
      %p97 = por %p95, %p96
      %p98 = scmp.ne.s32.totalorder %s90, %s92
      %p99 = scmp.eq.s32.totalorder %s26, 3
      %p100 = por %p98, %p99
      %p101 = scmp.ne.s32.totalorder %s92, %s93
      %p102 = scmp.eq.s32.totalorder %s26, 0
      %p103 = por %p101, %p102
      %p104 = scmp.ne.s32.totalorder %s92, %s93
      %p105 = scmp.eq.s32.totalorder %s27, 3
      %p106 = por %p104, %p105
      %p108 = scmp.ne.s32.totalorder %s93, %s107
      %p109 = scmp.eq.s32.totalorder %s27, 0
      %p110 = por %p108, %p109
      %s111 = ssub.s32 %s28, %s40
      %s112 = ssub.s32 %s29, %s36
      %s113 = sor.u32 %s111, %s112
      %p114 = scmp.eq.s32.totalorder %s113, 0
      %s116 = sadd.s32 %s115, 1
      %s117 = scalar_select %p114, %s115, %s116
      %p120 = pneg %p114
      %p121 = scmp.eq.s32.totalorder %s21, 3
      %p122 = por %p120, %p121
      %p123 = scmp.ne.s32.totalorder %s115, %s118
      %p124 = scmp.eq.s32.totalorder %s21, 0
      %p125 = por %p123, %p124
      %p126 = scmp.ne.s32.totalorder %s115, %s118
      %p127 = scmp.eq.s32.totalorder %s26, 3
      %p128 = por %p126, %p127
      %p129 = scmp.ne.s32.totalorder %s118, %s119
      %p130 = scmp.eq.s32.totalorder %s26, 0
      %p131 = por %p129, %p130
      %p132 = scmp.ne.s32.totalorder %s118, %s119
      %p133 = scmp.eq.s32.totalorder %s27, 3
      %p134 = por %p132, %p133
      %p136 = scmp.ne.s32.totalorder %s119, %s135
      %p137 = scmp.eq.s32.totalorder %s27, 0
      %p138 = por %p136, %p137
      %s139 = ssub.s32 %s28, %s40
      %s140 = ssub.s32 %s29, %s36
      %s141 = sor.u32 %s139, %s140
      %p142 = scmp.eq.s32.totalorder %s141, 0
      %s144 = sadd.s32 %s143, 1
      %s145 = scalar_select %p142, %s143, %s144
      %p148 = pneg %p142
      %p149 = scmp.eq.s32.totalorder %s21, 3
      %p150 = por %p148, %p149
      %p151 = scmp.ne.s32.totalorder %s143, %s146
      %p152 = scmp.eq.s32.totalorder %s21, 0
      %p153 = por %p151, %p152
      %p154 = scmp.ne.s32.totalorder %s143, %s146
      %p155 = scmp.eq.s32.totalorder %s26, 3
      %p156 = por %p154, %p155
      %p157 = scmp.ne.s32.totalorder %s146, %s147
      %p158 = scmp.eq.s32.totalorder %s26, 0
      %p159 = por %p157, %p158
      %p160 = scmp.ne.s32.totalorder %s146, %s147
      %p161 = scmp.eq.s32.totalorder %s27, 3
      %p162 = por %p160, %p161
      %p164 = scmp.ne.s32.totalorder %s147, %s163
      %p165 = scmp.eq.s32.totalorder %s27, 0
      %p166 = por %p164, %p165
      %p167 = scmp.le.s32.totalorder 1, %s21
      %p168 = scmp.lt.s32.totalorder %s21, 5
      %p169 = pnand %p167, %p168
      %p170 = pneg %p169
      // Predicated region
      $region9: #{tpu_custom_call.1} parent=5 // pred_check
        _
      $region10: #{tpu_custom_call.1} parent=5 // pred_check_branch
        %172 = sbr.rel (%p169) target = $region12
      $region11: #{tpu_custom_call.1} parent=5 // pred_region
        %s173 = ssub.s32 %s21, 1
        // Predicated region
        $region13: #{tpu_custom_call.1} parent=11 // pred_check
          %p174 = pneg %p82
        $region14: #{tpu_custom_call.1} parent=11 // pred_check_branch
          %176 = sbr.rel (%p174) target = $region16
        $region15: #{tpu_custom_call.1} parent=11 // pred_region
          %178 = vsyncadd [#allocation6], 0
          %s179 = sshll.u32 %s1, 4
          %s180 = int_to_ptr.hbm [resolvable:$true] %s179
          %s181 = sshll.u32 [#allocation5], 4
          %s182 = int_to_ptr.vmem [resolvable:$true] %s181
          %187 = dma.hbm_to_vmem [thread:$0]  %s180, 1024, %s182, [#allocation6], 64, 64, 4
        $region16: #{tpu_custom_call.1} parent=11 // pred_fallthru
          _
        // Predicated region
        $region17: #{tpu_custom_call.1} parent=11 // pred_check
          %p188 = pneg %p103
        $region18: #{tpu_custom_call.1} parent=11 // pred_check_branch
          %190 = sbr.rel (%p188) target = $region20
        $region19: #{tpu_custom_call.1} parent=11 // pred_region
          %192 = vsyncadd [#allocation6], 0
          %s193 = sshll.u32 %s2, 4
          %s194 = int_to_ptr.hbm [resolvable:$true] %s193
          %s195 = sshll.u32 [#allocation7], 4
          %s196 = int_to_ptr.vmem [resolvable:$true] %s195
          %201 = dma.hbm_to_vmem [thread:$0]  %s194, 2048, %s196, [#allocation6], 64, 64, 4
        $region20: #{tpu_custom_call.1} parent=11 // pred_fallthru
          _
      $region12: #{tpu_custom_call.1} parent=5 // pred_fallthru
        _
      %p202 = scmp.lt.s32.totalorder %s21, 4
      // Predicated region
      $region21: #{tpu_custom_call.1} parent=5 // pred_check
        %p203 = pneg %p202
      $region22: #{tpu_custom_call.1} parent=5 // pred_check_branch
        %205 = sbr.rel (%p203) target = $region24
      $region23: #{tpu_custom_call.1} parent=5 // pred_region
        // Predicated region
        $region25: #{tpu_custom_call.1} parent=23 // pred_check
          %p206 = pneg %p55
        $region26: #{tpu_custom_call.1} parent=23 // pred_check_branch
          %208 = sbr.rel (%p206) target = $region28
        $region27: #{tpu_custom_call.1} parent=23 // pred_region
          %s209 = sand.u32 %s45, 1
          %s210 = scalar_lea.sflag [#allocation3], %s209
          %s211 = sand.u32 %s45, 1
          %s212 = smul.addr %s211, 128
          %s213 = scalar_lea.vmem [#allocation2], %s212
          %s214 = smul.u32 32, %s29
          %216 = vsyncadd %s210, 0
          %s217 = smul.addr %s28, 64
          %s218 = sadd.s32 %s214, %s217
          %s219 = smul.addr %s218, 4
          %s220 = scalar_lea.hbm %s0, %s219
          %s221 = sshll.u32 %s220, 4
          %s222 = int_to_ptr.hbm [resolvable:$true] %s221
          %s223 = sshll.u32 %s213, 4
          %s224 = int_to_ptr.vmem [resolvable:$true] %s223
          %229 = dma.hbm_to_vmem [thread:$0]  %s222, 2048, %s224, %s210, 64, 64, 4
        $region28: #{tpu_custom_call.1} parent=23 // pred_fallthru
          _
      $region24: #{tpu_custom_call.1} parent=5 // pred_fallthru
        _
      %p230 = scmp.le.s32.totalorder 1, %s21
      %p231 = scmp.lt.s32.totalorder %s21, 5
      %p232 = pnand %p230, %p231
      %p233 = pneg %p232
      // Predicated region
      $region29: #{tpu_custom_call.1} parent=5 // pred_check
        _
      $region30: #{tpu_custom_call.1} parent=5 // pred_check_branch
        %235 = sbr.rel (%p232) target = $region32
      $region31: #{tpu_custom_call.1} parent=5 // pred_region
        %s236 = ssub.s32 %s21, 1
        %s237 = sand.u32 %s48, 1
        %s238 = scalar_lea.sflag [#allocation3], %s237
        %s239 = sand.u32 %s48, 1
        %s240 = smul.addr %s239, 128
        %s241 = scalar_lea.vmem [#allocation2], %s240
        // Predicated region
        $region33: #{tpu_custom_call.1} parent=31 // pred_check
          %p242 = pneg %p61
        $region34: #{tpu_custom_call.1} parent=31 // pred_check_branch
          %244 = sbr.rel (%p242) target = $region36
        $region35: #{tpu_custom_call.1} parent=31 // pred_region
          %246 = dma.done %s238, 2048
        $region36: #{tpu_custom_call.1} parent=31 // pred_fallthru
          _
        // Predicated region
        $region37: #{tpu_custom_call.1} parent=31 // pred_check
          %p247 = pneg %p82
        $region38: #{tpu_custom_call.1} parent=31 // pred_check_branch
          %249 = sbr.rel (%p247) target = $region40
        $region39: #{tpu_custom_call.1} parent=31 // pred_region
          %251 = dma.done [#allocation6], 1024
        $region40: #{tpu_custom_call.1} parent=31 // pred_fallthru
          _
        // Predicated region
        $region41: #{tpu_custom_call.1} parent=31 // pred_check
          %p252 = pneg %p103
        $region42: #{tpu_custom_call.1} parent=31 // pred_check_branch
          %254 = sbr.rel (%p252) target = $region44
        $region43: #{tpu_custom_call.1} parent=31 // pred_region
          %256 = dma.done [#allocation6], 2048
        $region44: #{tpu_custom_call.1} parent=31 // pred_fallthru
          _
        %s257 = sand.u32 %s48, 1
        %s258 = scalar_lea.sflag [#allocation3], %s257
        %s259 = sand.u32 %s48, 1
        %s260 = smul.addr %s259, 128
        %s261 = scalar_lea.vmem [#allocation2], %s260
        %p262 = pneg %p61
        %p263 = pneg %p58
        %p264 = pneg %p82
        %p265 = pneg %p79
        %p266 = pneg %p103
        %p267 = pneg %p100
        %p268 = pneg %p131
        %p269 = pneg %p128
        %s270 = sand.u32 %s118, 1
        %s271 = scalar_lea.sflag [#allocation4], %s270
        %s272 = sand.u32 %s118, 1
        %s273 = smul.addr %s272, 128
        %s274 = scalar_lea.vmem [#allocation8], %s273
        %p275 = pneg %p159
        %p276 = pneg %p156
        %s277 = sand.u32 %s146, 1
        %s278 = scalar_lea.sflag [#allocation10], %s277
        %s279 = sand.u32 %s146, 1
        %s280 = smul.addr %s279, 256
        %s281 = scalar_lea.vmem [#allocation9], %s280
        %s282 = smul.u32 32, %s31
        %s283 = smul.u32 32, %s31
        %s284 = smul.u32 2, %s31
        %v285 = vld [vmem:[%s241] sm:$0xf]
        %v286 = vld [vmem:[%s241 + $0x4] sm:$0xf]
        %v287 = vld [vmem:[%s241 + $0x8] sm:$0xf]
        %v288 = vld [vmem:[%s241 + $0xc] sm:$0xf]
        %v289 = vld [vmem:[%s241 + $0x10] sm:$0xf]
        %v290 = vld [vmem:[%s241 + $0x14] sm:$0xf]
        %v291 = vld [vmem:[%s241 + $0x18] sm:$0xf]
        %v292 = vld [vmem:[%s241 + $0x1c] sm:$0xf]
        %v293 = vld [vmem:[%s241 + $0x20] sm:$0xf]
        %v294 = vld [vmem:[%s241 + $0x24] sm:$0xf]
        %v295 = vld [vmem:[%s241 + $0x28] sm:$0xf]
        %v296 = vld [vmem:[%s241 + $0x2c] sm:$0xf]
        %v297 = vld [vmem:[%s241 + $0x30] sm:$0xf]
        %v298 = vld [vmem:[%s241 + $0x34] sm:$0xf]
        %v299 = vld [vmem:[%s241 + $0x38] sm:$0xf]
        %v300 = vld [vmem:[%s241 + $0x3c] sm:$0xf]
        %v301 = vld [vmem:[%s241 + $0x40] sm:$0xf]
        %v302 = vld [vmem:[%s241 + $0x44] sm:$0xf]
        %v303 = vld [vmem:[%s241 + $0x48] sm:$0xf]
        %v304 = vld [vmem:[%s241 + $0x4c] sm:$0xf]
        %v305 = vld [vmem:[%s241 + $0x50] sm:$0xf]
        %v306 = vld [vmem:[%s241 + $0x54] sm:$0xf]
        %v307 = vld [vmem:[%s241 + $0x58] sm:$0xf]
        %v308 = vld [vmem:[%s241 + $0x5c] sm:$0xf]
        %v309 = vld [vmem:[%s241 + $0x60] sm:$0xf]
        %v310 = vld [vmem:[%s241 + $0x64] sm:$0xf]
        %v311 = vld [vmem:[%s241 + $0x68] sm:$0xf]
        %v312 = vld [vmem:[%s241 + $0x6c] sm:$0xf]
        %v313 = vld [vmem:[%s241 + $0x70] sm:$0xf]
        %v314 = vld [vmem:[%s241 + $0x74] sm:$0xf]
        %v315 = vld [vmem:[%s241 + $0x78] sm:$0xf]
        %v316 = vld [vmem:[%s241 + $0x7c] sm:$0xf]
        %v317 = vld [vmem:[#allocation5] sm:$0xf]
        %v318 = vld [vmem:[#allocation5 + $0x4] sm:$0xf]
        %v319 = vld [vmem:[#allocation5 + $0x8] sm:$0xf]
        %v320 = vld [vmem:[#allocation5 + $0xc] sm:$0xf]
        %v321 = vld [vmem:[#allocation5 + $0x10] sm:$0xf]
        %v322 = vld [vmem:[#allocation5 + $0x14] sm:$0xf]
        %v323 = vld [vmem:[#allocation5 + $0x18] sm:$0xf]
        %v324 = vld [vmem:[#allocation5 + $0x1c] sm:$0xf]
        %v325 = vld [vmem:[#allocation5 + $0x20] sm:$0xf]
        %v326 = vld [vmem:[#allocation5 + $0x24] sm:$0xf]
        %v327 = vld [vmem:[#allocation5 + $0x28] sm:$0xf]
        %v328 = vld [vmem:[#allocation5 + $0x2c] sm:$0xf]
        %v329 = vld [vmem:[#allocation5 + $0x30] sm:$0xf]
        %v330 = vld [vmem:[#allocation5 + $0x34] sm:$0xf]
        %v331 = vld [vmem:[#allocation5 + $0x38] sm:$0xf]
        %v332 = vld [vmem:[#allocation5 + $0x3c] sm:$0xf]
        %v365 = vunpack.c.l.b16 %v285
        %v366 = vunpack.c.l.b16 %v286
        %v367 = vunpack.c.l.b16 %v287
        %v368 = vunpack.c.l.b16 %v288
        %v369 = vunpack.c.l.b16 %v289
        %v370 = vunpack.c.l.b16 %v290
        %v371 = vunpack.c.l.b16 %v291
        %v372 = vunpack.c.l.b16 %v292
        %v373 = vunpack.c.l.b16 %v293
        %v374 = vunpack.c.l.b16 %v294
        %v375 = vunpack.c.l.b16 %v295
        %v376 = vunpack.c.l.b16 %v296
        %v377 = vunpack.c.l.b16 %v297
        %v378 = vunpack.c.l.b16 %v298
        %v379 = vunpack.c.l.b16 %v299
        %v380 = vunpack.c.l.b16 %v300
        %v381 = vunpack.c.l.b16 %v301
        %v382 = vunpack.c.l.b16 %v302
        %v383 = vunpack.c.l.b16 %v303
        %v384 = vunpack.c.l.b16 %v304
        %v385 = vunpack.c.l.b16 %v305
        %v386 = vunpack.c.l.b16 %v306
        %v387 = vunpack.c.l.b16 %v307
        %v388 = vunpack.c.l.b16 %v308
        %v389 = vunpack.c.l.b16 %v309
        %v390 = vunpack.c.l.b16 %v310
        %v391 = vunpack.c.l.b16 %v311
        %v392 = vunpack.c.l.b16 %v312
        %v393 = vunpack.c.l.b16 %v313
        %v394 = vunpack.c.l.b16 %v314
        %v395 = vunpack.c.l.b16 %v315
        %v396 = vunpack.c.l.b16 %v316
        %v397 = vpack.c.b16 %v366, %v365
        %v398 = vpack.c.b16 %v368, %v367
        %v399 = vpack.c.b16 %v370, %v369
        %v400 = vpack.c.b16 %v372, %v371
        %v401 = vpack.c.b16 %v374, %v373
        %v402 = vpack.c.b16 %v376, %v375
        %v403 = vpack.c.b16 %v378, %v377
        %v404 = vpack.c.b16 %v380, %v379
        %v405 = vpack.c.b16 %v382, %v381
        %v406 = vpack.c.b16 %v384, %v383
        %v407 = vpack.c.b16 %v386, %v385
        %v408 = vpack.c.b16 %v388, %v387
        %v409 = vpack.c.b16 %v390, %v389
        %v410 = vpack.c.b16 %v392, %v391
        %v411 = vpack.c.b16 %v394, %v393
        %v412 = vpack.c.b16 %v396, %v395
        %v445 = vunpack.c.l.b16 %v317
        %v446 = vunpack.c.l.b16 %v318
        %v447 = vunpack.c.l.b16 %v319
        %v448 = vunpack.c.l.b16 %v320
        %v449 = vunpack.c.l.b16 %v321
        %v450 = vunpack.c.l.b16 %v322
        %v451 = vunpack.c.l.b16 %v323
        %v452 = vunpack.c.l.b16 %v324
        %v453 = vunpack.c.l.b16 %v325
        %v454 = vunpack.c.l.b16 %v326
        %v455 = vunpack.c.l.b16 %v327
        %v456 = vunpack.c.l.b16 %v328
        %v457 = vunpack.c.l.b16 %v329
        %v458 = vunpack.c.l.b16 %v330
        %v459 = vunpack.c.l.b16 %v331
        %v460 = vunpack.c.l.b16 %v332
        %v461 = vpack.c.b16 %v446, %v445
        %v462 = vpack.c.b16 %v448, %v447
        %v463 = vpack.c.b16 %v450, %v449
        %v464 = vpack.c.b16 %v452, %v451
        %v465 = vpack.c.b16 %v454, %v453
        %v466 = vpack.c.b16 %v456, %v455
        %v467 = vpack.c.b16 %v458, %v457
        %v468 = vpack.c.b16 %v460, %v459
        %477 = vmatpush.bf16.msra.mxu0 %v468
        %478 = vmatpush.bf16.msra.mxu0 %v467
        %479 = vmatpush.bf16.msra.mxu0 %v466
        %480 = vmatpush.bf16.msra.mxu0 %v465
        %481 = vmatpush.bf16.msra.mxu0 %v464
        %482 = vmatpush.bf16.msra.mxu0 %v463
        %483 = vmatpush.bf16.msra.mxu0 %v462
        %484 = vmatpush.bf16.msra.mxu0 %v461
        %485 = vmatmul.bf16.gmra.mxu0 %v397
        %v486 = vpop.f32.mrf.mxu0
        %v487 = vadd.f32 0.0, %v486
        %v488 = vpop.f32.mrf.mxu0
        %v489 = vadd.f32 0.0, %v488
        %490 = vmatmul.bf16.gmra.mxu0 %v398
        %v491 = vpop.f32.mrf.mxu0
        %v492 = vadd.f32 0.0, %v491
        %v493 = vpop.f32.mrf.mxu0
        %v494 = vadd.f32 0.0, %v493
        %495 = vmatmul.bf16.gmra.mxu0 %v399
        %v496 = vpop.f32.mrf.mxu0
        %v497 = vadd.f32 0.0, %v496
        %v498 = vpop.f32.mrf.mxu0
        %v499 = vadd.f32 0.0, %v498
        %500 = vmatmul.bf16.gmra.mxu0 %v400
        %v501 = vpop.f32.mrf.mxu0
        %v502 = vadd.f32 0.0, %v501
        %v503 = vpop.f32.mrf.mxu0
        %v504 = vadd.f32 0.0, %v503
        %505 = vmatmul.bf16.gmra.mxu0 %v401
        %v506 = vpop.f32.mrf.mxu0
        %v507 = vadd.f32 0.0, %v506
        %v508 = vpop.f32.mrf.mxu0
        %v509 = vadd.f32 0.0, %v508
        %510 = vmatmul.bf16.gmra.mxu0 %v402
        %v511 = vpop.f32.mrf.mxu0
        %v512 = vadd.f32 0.0, %v511
        %v513 = vpop.f32.mrf.mxu0
        %v514 = vadd.f32 0.0, %v513
        %515 = vmatmul.bf16.gmra.mxu0 %v403
        %v516 = vpop.f32.mrf.mxu0
        %v517 = vadd.f32 0.0, %v516
        %v518 = vpop.f32.mrf.mxu0
        %v519 = vadd.f32 0.0, %v518
        %520 = vmatmul.bf16.gmra.mxu0 %v404
        %v521 = vpop.f32.mrf.mxu0
        %v522 = vadd.f32 0.0, %v521
        %v523 = vpop.f32.mrf.mxu0
        %v524 = vadd.f32 0.0, %v523
        %525 = vmatmul.bf16.gmra.mxu0 %v405
        %v526 = vpop.f32.mrf.mxu0
        %v527 = vadd.f32 0.0, %v526
        %v528 = vpop.f32.mrf.mxu0
        %v529 = vadd.f32 0.0, %v528
        %530 = vmatmul.bf16.gmra.mxu0 %v406
        %v531 = vpop.f32.mrf.mxu0
        %v532 = vadd.f32 0.0, %v531
        %v533 = vpop.f32.mrf.mxu0
        %v534 = vadd.f32 0.0, %v533
        %535 = vmatmul.bf16.gmra.mxu0 %v407
        %v536 = vpop.f32.mrf.mxu0
        %v537 = vadd.f32 0.0, %v536
        %v538 = vpop.f32.mrf.mxu0
        %v539 = vadd.f32 0.0, %v538
        %540 = vmatmul.bf16.gmra.mxu0 %v408
        %v541 = vpop.f32.mrf.mxu0
        %v542 = vadd.f32 0.0, %v541
        %v543 = vpop.f32.mrf.mxu0
        %v544 = vadd.f32 0.0, %v543
        %545 = vmatmul.bf16.gmra.mxu0 %v409
        %v546 = vpop.f32.mrf.mxu0
        %v547 = vadd.f32 0.0, %v546
        %v548 = vpop.f32.mrf.mxu0
        %v549 = vadd.f32 0.0, %v548
        %550 = vmatmul.bf16.gmra.mxu0 %v410
        %v551 = vpop.f32.mrf.mxu0
        %v552 = vadd.f32 0.0, %v551
        %v553 = vpop.f32.mrf.mxu0
        %v554 = vadd.f32 0.0, %v553
        %555 = vmatmul.bf16.gmra.mxu0 %v411
        %v556 = vpop.f32.mrf.mxu0
        %v557 = vadd.f32 0.0, %v556
        %v558 = vpop.f32.mrf.mxu0
        %v559 = vadd.f32 0.0, %v558
        %560 = vmatmul.bf16.gmra.mxu0 %v412
        %v561 = vpop.f32.mrf.mxu0
        %v562 = vadd.f32 0.0, %v561
        %v563 = vpop.f32.mrf.mxu0
        %v564 = vadd.f32 0.0, %v563
        %565 = vdwg.mxu0
        %v566 = vpack.c.bf16 %v487, %v487
        %v567 = vpack.c.bf16 %v489, %v489
        %v568 = vpack.c.bf16 %v492, %v492
        %v569 = vpack.c.bf16 %v494, %v494
        %v570 = vpack.c.bf16 %v497, %v497
        %v571 = vpack.c.bf16 %v499, %v499
        %v572 = vpack.c.bf16 %v502, %v502
        %v573 = vpack.c.bf16 %v504, %v504
        %v574 = vpack.c.bf16 %v507, %v507
        %v575 = vpack.c.bf16 %v509, %v509
        %v576 = vpack.c.bf16 %v512, %v512
        %v577 = vpack.c.bf16 %v514, %v514
        %v578 = vpack.c.bf16 %v517, %v517
        %v579 = vpack.c.bf16 %v519, %v519
        %v580 = vpack.c.bf16 %v522, %v522
        %v581 = vpack.c.bf16 %v524, %v524
        %v582 = vpack.c.bf16 %v527, %v527
        %v583 = vpack.c.bf16 %v529, %v529
        %v584 = vpack.c.bf16 %v532, %v532
        %v585 = vpack.c.bf16 %v534, %v534
        %v586 = vpack.c.bf16 %v537, %v537
        %v587 = vpack.c.bf16 %v539, %v539
        %v588 = vpack.c.bf16 %v542, %v542
        %v589 = vpack.c.bf16 %v544, %v544
        %v590 = vpack.c.bf16 %v547, %v547
        %v591 = vpack.c.bf16 %v549, %v549
        %v592 = vpack.c.bf16 %v552, %v552
        %v593 = vpack.c.bf16 %v554, %v554
        %v594 = vpack.c.bf16 %v557, %v557
        %v595 = vpack.c.bf16 %v559, %v559
        %v596 = vpack.c.bf16 %v562, %v562
        %v597 = vpack.c.bf16 %v564, %v564
        %598 = vst [vmem:[%s274] sm:$0xf] %v566
        %599 = vst [vmem:[%s274 + $0x4] sm:$0xf] %v567
        %600 = vst [vmem:[%s274 + $0x8] sm:$0xf] %v568
        %601 = vst [vmem:[%s274 + $0xc] sm:$0xf] %v569
        %602 = vst [vmem:[%s274 + $0x10] sm:$0xf] %v570
        %603 = vst [vmem:[%s274 + $0x14] sm:$0xf] %v571
        %604 = vst [vmem:[%s274 + $0x18] sm:$0xf] %v572
        %605 = vst [vmem:[%s274 + $0x1c] sm:$0xf] %v573
        %606 = vst [vmem:[%s274 + $0x20] sm:$0xf] %v574
        %607 = vst [vmem:[%s274 + $0x24] sm:$0xf] %v575
        %608 = vst [vmem:[%s274 + $0x28] sm:$0xf] %v576
        %609 = vst [vmem:[%s274 + $0x2c] sm:$0xf] %v577
        %610 = vst [vmem:[%s274 + $0x30] sm:$0xf] %v578
        %611 = vst [vmem:[%s274 + $0x34] sm:$0xf] %v579
        %612 = vst [vmem:[%s274 + $0x38] sm:$0xf] %v580
        %613 = vst [vmem:[%s274 + $0x3c] sm:$0xf] %v581
        %614 = vst [vmem:[%s274 + $0x40] sm:$0xf] %v582
        %615 = vst [vmem:[%s274 + $0x44] sm:$0xf] %v583
        %616 = vst [vmem:[%s274 + $0x48] sm:$0xf] %v584
        %617 = vst [vmem:[%s274 + $0x4c] sm:$0xf] %v585
        %618 = vst [vmem:[%s274 + $0x50] sm:$0xf] %v586
        %619 = vst [vmem:[%s274 + $0x54] sm:$0xf] %v587
        %620 = vst [vmem:[%s274 + $0x58] sm:$0xf] %v588
        %621 = vst [vmem:[%s274 + $0x5c] sm:$0xf] %v589
        %622 = vst [vmem:[%s274 + $0x60] sm:$0xf] %v590
        %623 = vst [vmem:[%s274 + $0x64] sm:$0xf] %v591
        %624 = vst [vmem:[%s274 + $0x68] sm:$0xf] %v592
        %625 = vst [vmem:[%s274 + $0x6c] sm:$0xf] %v593
        %626 = vst [vmem:[%s274 + $0x70] sm:$0xf] %v594
        %627 = vst [vmem:[%s274 + $0x74] sm:$0xf] %v595
        %628 = vst [vmem:[%s274 + $0x78] sm:$0xf] %v596
        %629 = vst [vmem:[%s274 + $0x7c] sm:$0xf] %v597
        %v630 = vld [vmem:[#allocation7] sm:$0xf]
        %v631 = vld [vmem:[#allocation7 + $0x4] sm:$0xf]
        %v632 = vld [vmem:[#allocation7 + $0x8] sm:$0xf]
        %v633 = vld [vmem:[#allocation7 + $0xc] sm:$0xf]
        %v634 = vld [vmem:[#allocation7 + $0x10] sm:$0xf]
        %v635 = vld [vmem:[#allocation7 + $0x14] sm:$0xf]
        %v636 = vld [vmem:[#allocation7 + $0x18] sm:$0xf]
        %v637 = vld [vmem:[#allocation7 + $0x1c] sm:$0xf]
        %v638 = vld [vmem:[#allocation7 + $0x20] sm:$0xf]
        %v639 = vld [vmem:[#allocation7 + $0x24] sm:$0xf]
        %v640 = vld [vmem:[#allocation7 + $0x28] sm:$0xf]
        %v641 = vld [vmem:[#allocation7 + $0x2c] sm:$0xf]
        %v642 = vld [vmem:[#allocation7 + $0x30] sm:$0xf]
        %v643 = vld [vmem:[#allocation7 + $0x34] sm:$0xf]
        %v644 = vld [vmem:[#allocation7 + $0x38] sm:$0xf]
        %v645 = vld [vmem:[#allocation7 + $0x3c] sm:$0xf]
        %v646 = vld [vmem:[#allocation7 + $0x40] sm:$0xf]
        %v647 = vld [vmem:[#allocation7 + $0x44] sm:$0xf]
        %v648 = vld [vmem:[#allocation7 + $0x48] sm:$0xf]
        %v649 = vld [vmem:[#allocation7 + $0x4c] sm:$0xf]
        %v650 = vld [vmem:[#allocation7 + $0x50] sm:$0xf]
        %v651 = vld [vmem:[#allocation7 + $0x54] sm:$0xf]
        %v652 = vld [vmem:[#allocation7 + $0x58] sm:$0xf]
        %v653 = vld [vmem:[#allocation7 + $0x5c] sm:$0xf]
        %v654 = vld [vmem:[#allocation7 + $0x60] sm:$0xf]
        %v655 = vld [vmem:[#allocation7 + $0x64] sm:$0xf]
        %v656 = vld [vmem:[#allocation7 + $0x68] sm:$0xf]
        %v657 = vld [vmem:[#allocation7 + $0x6c] sm:$0xf]
        %v658 = vld [vmem:[#allocation7 + $0x70] sm:$0xf]
        %v659 = vld [vmem:[#allocation7 + $0x74] sm:$0xf]
        %v660 = vld [vmem:[#allocation7 + $0x78] sm:$0xf]
        %v661 = vld [vmem:[#allocation7 + $0x7c] sm:$0xf]
        %v694 = vunpack.c.l.b16 %v630
        %v695 = vunpack.c.l.b16 %v631
        %v696 = vunpack.c.l.b16 %v632
        %v697 = vunpack.c.l.b16 %v633
        %v698 = vunpack.c.l.b16 %v634
        %v699 = vunpack.c.l.b16 %v635
        %v700 = vunpack.c.l.b16 %v636
        %v701 = vunpack.c.l.b16 %v637
        %v702 = vunpack.c.l.b16 %v638
        %v703 = vunpack.c.l.b16 %v639
        %v704 = vunpack.c.l.b16 %v640
        %v705 = vunpack.c.l.b16 %v641
        %v706 = vunpack.c.l.b16 %v642
        %v707 = vunpack.c.l.b16 %v643
        %v708 = vunpack.c.l.b16 %v644
        %v709 = vunpack.c.l.b16 %v645
        %v710 = vunpack.c.l.b16 %v646
        %v711 = vunpack.c.l.b16 %v647
        %v712 = vunpack.c.l.b16 %v648
        %v713 = vunpack.c.l.b16 %v649
        %v714 = vunpack.c.l.b16 %v650
        %v715 = vunpack.c.l.b16 %v651
        %v716 = vunpack.c.l.b16 %v652
        %v717 = vunpack.c.l.b16 %v653
        %v718 = vunpack.c.l.b16 %v654
        %v719 = vunpack.c.l.b16 %v655
        %v720 = vunpack.c.l.b16 %v656
        %v721 = vunpack.c.l.b16 %v657
        %v722 = vunpack.c.l.b16 %v658
        %v723 = vunpack.c.l.b16 %v659
        %v724 = vunpack.c.l.b16 %v660
        %v725 = vunpack.c.l.b16 %v661
        %v726 = vpack.c.b16 %v695, %v694
        %v727 = vpack.c.b16 %v697, %v696
        %v728 = vpack.c.b16 %v699, %v698
        %v729 = vpack.c.b16 %v701, %v700
        %v730 = vpack.c.b16 %v703, %v702
        %v731 = vpack.c.b16 %v705, %v704
        %v732 = vpack.c.b16 %v707, %v706
        %v733 = vpack.c.b16 %v709, %v708
        %v734 = vpack.c.b16 %v711, %v710
        %v735 = vpack.c.b16 %v713, %v712
        %v736 = vpack.c.b16 %v715, %v714
        %v737 = vpack.c.b16 %v717, %v716
        %v738 = vpack.c.b16 %v719, %v718
        %v739 = vpack.c.b16 %v721, %v720
        %v740 = vpack.c.b16 %v723, %v722
        %v741 = vpack.c.b16 %v725, %v724
        %758 = vmatpush.bf16.xpose.msra.mxu0 %v404
        %759 = vmatpush.bf16.xpose.msra.mxu0 %v403
        %760 = vmatpush.bf16.xpose.msra.mxu0 %v402
        %761 = vmatpush.bf16.xpose.msra.mxu0 %v401
        %762 = vmatpush.bf16.xpose.msra.mxu0 %v400
        %763 = vmatpush.bf16.xpose.msra.mxu0 %v399
        %764 = vmatpush.bf16.xpose.msra.mxu0 %v398
        %765 = vmatpush.bf16.xpose.msra.mxu0 %v397
        %766 = vmatmul.bf16.gmra.mxu0 %v726
        %v767 = vpop.f32.mrf.mxu0
        %v768 = vadd.f32 0.0, %v767
        %v769 = vpop.f32.mrf.mxu0
        %v770 = vadd.f32 0.0, %v769
        %771 = vmatmul.bf16.gmra.mxu0 %v727
        %v772 = vpop.f32.mrf.mxu0
        %v773 = vadd.f32 0.0, %v772
        %v774 = vpop.f32.mrf.mxu0
        %v775 = vadd.f32 0.0, %v774
        %776 = vmatmul.bf16.gmra.mxu0 %v728
        %v777 = vpop.f32.mrf.mxu0
        %v778 = vadd.f32 0.0, %v777
        %v779 = vpop.f32.mrf.mxu0
        %v780 = vadd.f32 0.0, %v779
        %781 = vmatmul.bf16.gmra.mxu0 %v729
        %v782 = vpop.f32.mrf.mxu0
        %v783 = vadd.f32 0.0, %v782
        %v784 = vpop.f32.mrf.mxu0
        %v785 = vadd.f32 0.0, %v784
        %786 = vmatmul.bf16.gmra.mxu0 %v730
        %v787 = vpop.f32.mrf.mxu0
        %v788 = vadd.f32 0.0, %v787
        %v789 = vpop.f32.mrf.mxu0
        %v790 = vadd.f32 0.0, %v789
        %791 = vmatmul.bf16.gmra.mxu0 %v731
        %v792 = vpop.f32.mrf.mxu0
        %v793 = vadd.f32 0.0, %v792
        %v794 = vpop.f32.mrf.mxu0
        %v795 = vadd.f32 0.0, %v794
        %796 = vmatmul.bf16.gmra.mxu0 %v732
        %v797 = vpop.f32.mrf.mxu0
        %v798 = vadd.f32 0.0, %v797
        %v799 = vpop.f32.mrf.mxu0
        %v800 = vadd.f32 0.0, %v799
        %801 = vmatmul.bf16.gmra.mxu0 %v733
        %v802 = vpop.f32.mrf.mxu0
        %v803 = vadd.f32 0.0, %v802
        %v804 = vpop.f32.mrf.mxu0
        %v805 = vadd.f32 0.0, %v804
        %806 = vmatmul.bf16.gmra.mxu0 %v734
        %v807 = vpop.f32.mrf.mxu0
        %v808 = vadd.f32 0.0, %v807
        %v809 = vpop.f32.mrf.mxu0
        %v810 = vadd.f32 0.0, %v809
        %811 = vmatmul.bf16.gmra.mxu0 %v735
        %v812 = vpop.f32.mrf.mxu0
        %v813 = vadd.f32 0.0, %v812
        %v814 = vpop.f32.mrf.mxu0
        %v815 = vadd.f32 0.0, %v814
        %816 = vmatmul.bf16.gmra.mxu0 %v736
        %v817 = vpop.f32.mrf.mxu0
        %v818 = vadd.f32 0.0, %v817
        %v819 = vpop.f32.mrf.mxu0
        %v820 = vadd.f32 0.0, %v819
        %821 = vmatmul.bf16.gmra.mxu0 %v737
        %v822 = vpop.f32.mrf.mxu0
        %v823 = vadd.f32 0.0, %v822
        %v824 = vpop.f32.mrf.mxu0
        %v825 = vadd.f32 0.0, %v824
        %826 = vmatmul.bf16.gmra.mxu0 %v738
        %v827 = vpop.f32.mrf.mxu0
        %v828 = vadd.f32 0.0, %v827
        %v829 = vpop.f32.mrf.mxu0
        %v830 = vadd.f32 0.0, %v829
        %831 = vmatmul.bf16.gmra.mxu0 %v739
        %v832 = vpop.f32.mrf.mxu0
        %v833 = vadd.f32 0.0, %v832
        %v834 = vpop.f32.mrf.mxu0
        %v835 = vadd.f32 0.0, %v834
        %836 = vmatmul.bf16.gmra.mxu0 %v740
        %v837 = vpop.f32.mrf.mxu0
        %v838 = vadd.f32 0.0, %v837
        %v839 = vpop.f32.mrf.mxu0
        %v840 = vadd.f32 0.0, %v839
        %841 = vmatmul.bf16.gmra.mxu0 %v741
        %v842 = vpop.f32.mrf.mxu0
        %v843 = vadd.f32 0.0, %v842
        %v844 = vpop.f32.mrf.mxu0
        %v845 = vadd.f32 0.0, %v844
        %846 = vdwg.mxu0
        %847 = vmatpush.bf16.xpose.msra.mxu0 %v412
        %848 = vmatpush.bf16.xpose.msra.mxu0 %v411
        %849 = vmatpush.bf16.xpose.msra.mxu0 %v410
        %850 = vmatpush.bf16.xpose.msra.mxu0 %v409
        %851 = vmatpush.bf16.xpose.msra.mxu0 %v408
        %852 = vmatpush.bf16.xpose.msra.mxu0 %v407
        %853 = vmatpush.bf16.xpose.msra.mxu0 %v406
        %854 = vmatpush.bf16.xpose.msra.mxu0 %v405
        %855 = vmatmul.bf16.gmra.mxu0 %v726
        %v856 = vpop.f32.mrf.mxu0
        %v857 = vadd.f32 0.0, %v856
        %v858 = vpop.f32.mrf.mxu0
        %v859 = vadd.f32 0.0, %v858
        %860 = vmatmul.bf16.gmra.mxu0 %v727
        %v861 = vpop.f32.mrf.mxu0
        %v862 = vadd.f32 0.0, %v861
        %v863 = vpop.f32.mrf.mxu0
        %v864 = vadd.f32 0.0, %v863
        %865 = vmatmul.bf16.gmra.mxu0 %v728
        %v866 = vpop.f32.mrf.mxu0
        %v867 = vadd.f32 0.0, %v866
        %v868 = vpop.f32.mrf.mxu0
        %v869 = vadd.f32 0.0, %v868
        %870 = vmatmul.bf16.gmra.mxu0 %v729
        %v871 = vpop.f32.mrf.mxu0
        %v872 = vadd.f32 0.0, %v871
        %v873 = vpop.f32.mrf.mxu0
        %v874 = vadd.f32 0.0, %v873
        %875 = vmatmul.bf16.gmra.mxu0 %v730
        %v876 = vpop.f32.mrf.mxu0
        %v877 = vadd.f32 0.0, %v876
        %v878 = vpop.f32.mrf.mxu0
        %v879 = vadd.f32 0.0, %v878
        %880 = vmatmul.bf16.gmra.mxu0 %v731
        %v881 = vpop.f32.mrf.mxu0
        %v882 = vadd.f32 0.0, %v881
        %v883 = vpop.f32.mrf.mxu0
        %v884 = vadd.f32 0.0, %v883
        %885 = vmatmul.bf16.gmra.mxu0 %v732
        %v886 = vpop.f32.mrf.mxu0
        %v887 = vadd.f32 0.0, %v886
        %v888 = vpop.f32.mrf.mxu0
        %v889 = vadd.f32 0.0, %v888
        %890 = vmatmul.bf16.gmra.mxu0 %v733
        %v891 = vpop.f32.mrf.mxu0
        %v892 = vadd.f32 0.0, %v891
        %v893 = vpop.f32.mrf.mxu0
        %v894 = vadd.f32 0.0, %v893
        %895 = vmatmul.bf16.gmra.mxu0 %v734
        %v896 = vpop.f32.mrf.mxu0
        %v897 = vadd.f32 0.0, %v896
        %v898 = vpop.f32.mrf.mxu0
        %v899 = vadd.f32 0.0, %v898
        %900 = vmatmul.bf16.gmra.mxu0 %v735
        %v901 = vpop.f32.mrf.mxu0
        %v902 = vadd.f32 0.0, %v901
        %v903 = vpop.f32.mrf.mxu0
        %v904 = vadd.f32 0.0, %v903
        %905 = vmatmul.bf16.gmra.mxu0 %v736
        %v906 = vpop.f32.mrf.mxu0
        %v907 = vadd.f32 0.0, %v906
        %v908 = vpop.f32.mrf.mxu0
        %v909 = vadd.f32 0.0, %v908
        %910 = vmatmul.bf16.gmra.mxu0 %v737
        %v911 = vpop.f32.mrf.mxu0
        %v912 = vadd.f32 0.0, %v911
        %v913 = vpop.f32.mrf.mxu0
        %v914 = vadd.f32 0.0, %v913
        %915 = vmatmul.bf16.gmra.mxu0 %v738
        %v916 = vpop.f32.mrf.mxu0
        %v917 = vadd.f32 0.0, %v916
        %v918 = vpop.f32.mrf.mxu0
        %v919 = vadd.f32 0.0, %v918
        %920 = vmatmul.bf16.gmra.mxu0 %v739
        %v921 = vpop.f32.mrf.mxu0
        %v922 = vadd.f32 0.0, %v921
        %v923 = vpop.f32.mrf.mxu0
        %v924 = vadd.f32 0.0, %v923
        %925 = vmatmul.bf16.gmra.mxu0 %v740
        %v926 = vpop.f32.mrf.mxu0
        %v927 = vadd.f32 0.0, %v926
        %v928 = vpop.f32.mrf.mxu0
        %v929 = vadd.f32 0.0, %v928
        %930 = vmatmul.bf16.gmra.mxu0 %v741
        %v931 = vpop.f32.mrf.mxu0
        %v932 = vadd.f32 0.0, %v931
        %v933 = vpop.f32.mrf.mxu0
        %v934 = vadd.f32 0.0, %v933
        %935 = vdwg.mxu0
        %v936 = vpack.c.bf16 %v857, %v768
        %v937 = vpack.c.bf16 %v859, %v770
        %v938 = vpack.c.bf16 %v862, %v773
        %v939 = vpack.c.bf16 %v864, %v775
        %v940 = vpack.c.bf16 %v867, %v778
        %v941 = vpack.c.bf16 %v869, %v780
        %v942 = vpack.c.bf16 %v872, %v783
        %v943 = vpack.c.bf16 %v874, %v785
        %v944 = vpack.c.bf16 %v877, %v788
        %v945 = vpack.c.bf16 %v879, %v790
        %v946 = vpack.c.bf16 %v882, %v793
        %v947 = vpack.c.bf16 %v884, %v795
        %v948 = vpack.c.bf16 %v887, %v798
        %v949 = vpack.c.bf16 %v889, %v800
        %v950 = vpack.c.bf16 %v892, %v803
        %v951 = vpack.c.bf16 %v894, %v805
        %v952 = vpack.c.bf16 %v897, %v808
        %v953 = vpack.c.bf16 %v899, %v810
        %v954 = vpack.c.bf16 %v902, %v813
        %v955 = vpack.c.bf16 %v904, %v815
        %v956 = vpack.c.bf16 %v907, %v818
        %v957 = vpack.c.bf16 %v909, %v820
        %v958 = vpack.c.bf16 %v912, %v823
        %v959 = vpack.c.bf16 %v914, %v825
        %v960 = vpack.c.bf16 %v917, %v828
        %v961 = vpack.c.bf16 %v919, %v830
        %v962 = vpack.c.bf16 %v922, %v833
        %v963 = vpack.c.bf16 %v924, %v835
        %v964 = vpack.c.bf16 %v927, %v838
        %v965 = vpack.c.bf16 %v929, %v840
        %v966 = vpack.c.bf16 %v932, %v843
        %v967 = vpack.c.bf16 %v934, %v845
        %968 = vst [vmem:[%s281] sm:$0xff] %v936
        %969 = vst [vmem:[%s281 + $0x8] sm:$0xff] %v937
        %970 = vst [vmem:[%s281 + $0x10] sm:$0xff] %v938
        %971 = vst [vmem:[%s281 + $0x18] sm:$0xff] %v939
        %972 = vst [vmem:[%s281 + $0x20] sm:$0xff] %v940
        %973 = vst [vmem:[%s281 + $0x28] sm:$0xff] %v941
        %974 = vst [vmem:[%s281 + $0x30] sm:$0xff] %v942
        %975 = vst [vmem:[%s281 + $0x38] sm:$0xff] %v943
        %976 = vst [vmem:[%s281 + $0x40] sm:$0xff] %v944
        %977 = vst [vmem:[%s281 + $0x48] sm:$0xff] %v945
        %978 = vst [vmem:[%s281 + $0x50] sm:$0xff] %v946
        %979 = vst [vmem:[%s281 + $0x58] sm:$0xff] %v947
        %980 = vst [vmem:[%s281 + $0x60] sm:$0xff] %v948
        %981 = vst [vmem:[%s281 + $0x68] sm:$0xff] %v949
        %982 = vst [vmem:[%s281 + $0x70] sm:$0xff] %v950
        %983 = vst [vmem:[%s281 + $0x78] sm:$0xff] %v951
        %984 = vst [vmem:[%s281 + $0x80] sm:$0xff] %v952
        %985 = vst [vmem:[%s281 + $0x88] sm:$0xff] %v953
        %986 = vst [vmem:[%s281 + $0x90] sm:$0xff] %v954
        %987 = vst [vmem:[%s281 + $0x98] sm:$0xff] %v955
        %988 = vst [vmem:[%s281 + $0xa0] sm:$0xff] %v956
        %989 = vst [vmem:[%s281 + $0xa8] sm:$0xff] %v957
        %990 = vst [vmem:[%s281 + $0xb0] sm:$0xff] %v958
        %991 = vst [vmem:[%s281 + $0xb8] sm:$0xff] %v959
        %992 = vst [vmem:[%s281 + $0xc0] sm:$0xff] %v960
        %993 = vst [vmem:[%s281 + $0xc8] sm:$0xff] %v961
        %994 = vst [vmem:[%s281 + $0xd0] sm:$0xff] %v962
        %995 = vst [vmem:[%s281 + $0xd8] sm:$0xff] %v963
        %996 = vst [vmem:[%s281 + $0xe0] sm:$0xff] %v964
        %997 = vst [vmem:[%s281 + $0xe8] sm:$0xff] %v965
        %998 = vst [vmem:[%s281 + $0xf0] sm:$0xff] %v966
        %999 = vst [vmem:[%s281 + $0xf8] sm:$0xff] %v967
        %s1000 = sand.u32 %s118, 1
        %s1001 = scalar_lea.sflag [#allocation4], %s1000
        %s1002 = sand.u32 %s118, 1
        %s1003 = smul.addr %s1002, 128
        %s1004 = scalar_lea.vmem [#allocation8], %s1003
        %s1005 = sand.u32 %s146, 1
        %s1006 = scalar_lea.sflag [#allocation10], %s1005
        %s1007 = sand.u32 %s146, 1
        %s1008 = smul.addr %s1007, 256
        %s1009 = scalar_lea.vmem [#allocation9], %s1008
        // Predicated region
        $region45: #{tpu_custom_call.1} parent=31 // pred_check
          %p1010 = pneg %p128
        $region46: #{tpu_custom_call.1} parent=31 // pred_check_branch
          %1012 = sbr.rel (%p1010) target = $region48
        $region47: #{tpu_custom_call.1} parent=31 // pred_region
          %s1013 = smul.u32 32, %s31
          %1015 = vsyncadd %s1001, 0
          %s1016 = smul.addr %s30, 64
          %s1017 = sadd.s32 %s1013, %s1016
          %s1018 = smul.addr %s1017, 4
          %s1019 = scalar_lea.hbm %s3, %s1018
          %s1020 = sshll.u32 %s1004, 4
          %s1021 = int_to_ptr.vmem [resolvable:$true] %s1020
          %s1022 = sshll.u32 %s1019, 4
          %s1023 = int_to_ptr.hbm [resolvable:$true] %s1022
          %1028 = dma.vmem_to_hbm [thread:$0]  %s1021, 2048, %s1023, %s1001, 64, 64, 4
        $region48: #{tpu_custom_call.1} parent=31 // pred_fallthru
          _
        // Predicated region
        $region49: #{tpu_custom_call.1} parent=31 // pred_check
          %p1029 = pneg %p156
        $region50: #{tpu_custom_call.1} parent=31 // pred_check_branch
          %1031 = sbr.rel (%p1029) target = $region52
        $region51: #{tpu_custom_call.1} parent=31 // pred_region
          %s1032 = smul.u32 2, %s31
          %1034 = vsyncadd %s1006, 0
          %s1035 = smul.addr %s30, 128
          %s1036 = sadd.s32 %s1032, %s1035
          %s1037 = smul.addr %s1036, 4
          %s1038 = scalar_lea.hbm %s4, %s1037
          %s1039 = sshll.u32 %s1009, 4
          %s1040 = int_to_ptr.vmem [resolvable:$true] %s1039
          %s1041 = sshll.u32 %s1038, 4
          %s1042 = int_to_ptr.hbm [resolvable:$true] %s1041
          %1047 = dma.vmem_to_hbm [thread:$0]  %s1040, 4096, %s1042, %s1006, 128, 256, 8
        $region52: #{tpu_custom_call.1} parent=31 // pred_fallthru
          _
      $region32: #{tpu_custom_call.1} parent=5 // pred_fallthru
        _
      %p1048 = scmp.le.s32.totalorder 2, %s21
      // Predicated region
      $region53: #{tpu_custom_call.1} parent=5 // pred_check
        %p1049 = pneg %p1048
      $region54: #{tpu_custom_call.1} parent=5 // pred_check_branch
        %1051 = sbr.rel (%p1049) target = $region56
      $region55: #{tpu_custom_call.1} parent=5 // pred_region
        %s1052 = ssub.s32 %s21, 2
        // Predicated region
        $region57: #{tpu_custom_call.1} parent=55 // pred_check
          %p1053 = pneg %p134
        $region58: #{tpu_custom_call.1} parent=55 // pred_check_branch
          %1055 = sbr.rel (%p1053) target = $region60
        $region59: #{tpu_custom_call.1} parent=55 // pred_region
          %s1056 = sand.u32 %s119, 1
          %s1057 = scalar_lea.sflag [#allocation4], %s1056
          %s1058 = sand.u32 %s119, 1
          %s1059 = smul.addr %s1058, 128
          %s1060 = scalar_lea.vmem [#allocation8], %s1059
          %1062 = dma.done %s1057, 2048
        $region60: #{tpu_custom_call.1} parent=55 // pred_fallthru
          _
        // Predicated region
        $region61: #{tpu_custom_call.1} parent=55 // pred_check
          %p1063 = pneg %p162
        $region62: #{tpu_custom_call.1} parent=55 // pred_check_branch
          %1065 = sbr.rel (%p1063) target = $region64
        $region63: #{tpu_custom_call.1} parent=55 // pred_region
          %s1066 = sand.u32 %s147, 1
          %s1067 = scalar_lea.sflag [#allocation10], %s1066
          %s1068 = sand.u32 %s147, 1
          %s1069 = smul.addr %s1068, 256
          %s1070 = scalar_lea.vmem [#allocation9], %s1069
          %1072 = dma.done %s1067, 4096
        $region64: #{tpu_custom_call.1} parent=55 // pred_fallthru
          _
      $region56: #{tpu_custom_call.1} parent=5 // pred_fallthru
        _
    $region6: #{tpu_custom_call.1} parent=1 // loop_footer
      %s25 = sadd.s32 1, %s21
    $region7: #{tpu_custom_call.1} parent=1 // loop_footer_branch
      %20 = sbr.rel target = $region3
    $region8: #{tpu_custom_call.1} parent=1 // loop_exit
      _
    %1073 = vsyncpa [#allocation3], 1
    %s1074 = scalar_lea.sflag [#allocation3], 1
    %1075 = vsyncpa %s1074, 1
    %1076 = vsyncpa [#allocation6], 1
    %1077 = vsyncpa [#allocation4], 1
    %s1078 = scalar_lea.sflag [#allocation4], 1
    %1079 = vsyncpa %s1078, 1
    %1080 = vsyncpa [#allocation10], 1
    %s1081 = scalar_lea.sflag [#allocation10], 1
    %1082 = vsyncpa %s1081, 1

</llo_original>
